<compile_context>
chip_gen: v7x
topology: tpu7x:2x2x1
jax: 0.10.0
libtpu: 0.0.40
codegen_flags: <defaults>
</compile_context>

<pallas_src>
import functools

import jax
import jax.numpy as jnp
from jax.experimental import pallas as pl
from jax.experimental.pallas import tpu as pltpu


def _round_up(n, m):
    return ((n + m - 1) // m) * m


def _choose_tile(n, max_tile):
    """Pick the batch-lane tile.

    - n <= 128: one whole-array block (block == full dims, always legal).
    - otherwise: aim for >= 2 roughly balanced, 128-aligned grid steps so a
      v7x megacore can split them; cap at max_tile to bound VMEM.
    """
    if n <= 128:
        return n
    n128 = _round_up(n, 128)
    half = _round_up((n128 + 1) // 2, 128)
    return max(128, min(max_tile, half))


def _only_high_kernel(width, depth, mxu_dtype,
                      x_ref, yl_ref, mats_ref, vecs_ref, sc_ref, out_ref):
    """One batch tile (batch along lanes).

    x_ref, yl_ref, out_ref : (1, TB) VMEM
    mats_ref               : (max(depth,1)*width, width) VMEM, stacked W_i^T
    vecs_ref               : (width, depth + 4) VMEM column table:
        col 0: W0[0, :]   col 1: W0[1, :]   col 2: b0
        cols 3 .. 2+depth : hidden-layer biases
        col 3+depth       : (1-alpha) * W_last[:, 0]
    sc_ref                 : (3,) SMEM scalars [a_x, a_y, c_0] (folded LinearNet)
    """
    x = x_ref[...]                                   # (1, TB) f32
    yl = yl_ref[...]                                 # (1, TB) f32

    # --- NonLinearNet -------------------------------------------------------
    # First layer (in_dim = 2): pure VPU broadcast-FMAs (no concat, no matmul).
    w0x = vecs_ref[:, 0:1]                           # (width, 1)
    w0y = vecs_ref[:, 1:2]
    b0 = vecs_ref[:, 2:3]
    h = jnp.tanh(w0x * x + w0y * yl + b0)            # (width, TB) f32

    # Hidden (width x width) layers: MXU matmuls, lane-dense (TB) output.
    # Operands cast to mxu_dtype (bf16 by default); accumulate in f32.
    for i in range(depth):
        w_t = mats_ref[i * width:(i + 1) * width, :]           # (width, width)
        b_i = vecs_ref[:, 3 + i:4 + i]                         # (width, 1)
        hp = jnp.dot(w_t.astype(mxu_dtype), h.astype(mxu_dtype),
                     preferred_element_type=jnp.float32)
        h = jnp.tanh(hp + b_i)

    # Last (width -> 1) layer, (1-alpha) already folded in: multiply + sublane reduce.
    w_last = vecs_ref[:, 3 + depth:4 + depth]                  # (width, 1)
    y_nl = jnp.sum(w_last * h, axis=0, keepdims=True)          # (1, TB)

    # --- folded LinearNet + alpha blend (SMEM scalar splats) -----------------
    a_x = sc_ref[0]
    a_y = sc_ref[1]
    c_0 = sc_ref[2]
    out_ref[...] = a_x * x + a_y * yl + c_0 + y_nl


def only_high(x, yl, l_params, nl_params, alpha, *,
              max_tile=16384, mxu_dtype=jnp.bfloat16):
    """OnlyHigh forward: alpha * LinearNet(cat(x,yl)) + (1-alpha) * NonLinearNet(cat(x,yl))."""
    l_W, l_b = l_params
    nl_W, nl_b = nl_params
    n = x.shape[0]
    width = nl_W[0].shape[1]
    depth = len(nl_W) - 2                 # number of width x width hidden layers

    alpha_s = jnp.asarray(alpha, jnp.float32).reshape(-1)[0]

    # Fold the activation-free LinearNet into one affine map, scaled by alpha.
    A = jnp.eye(2, dtype=jnp.float32)
    c = jnp.zeros((1, 2), dtype=jnp.float32)
    for W, b in zip(l_W, l_b):
        A = A @ W
        c = c @ W + b
    a_x = alpha_s * A[0, 0]
    a_y = alpha_s * A[1, 0]

    # Fold (1 - alpha) into the nonlinear head; merge both output biases.
    w_last = (1.0 - alpha_s) * nl_W[-1][:, 0]                       # (width,)
    c_0 = alpha_s * c[0, 0] + (1.0 - alpha_s) * nl_b[-1][0, 0]

    # Pack parameters: one matrix slab + one column table + 3 SMEM scalars.
    if depth > 0:
        mats = jnp.concatenate([W.T for W in nl_W[1:-1]], axis=0)   # (depth*w, w)
    else:
        mats = jnp.zeros((8, width), jnp.float32)                   # unused dummy
    cols = [nl_W[0][0, :], nl_W[0][1, :], nl_b[0][0, :]]
    cols += [nl_b[1 + i][0, :] for i in range(depth)]
    cols += [w_last]
    vecs = jnp.stack(cols, axis=1).astype(jnp.float32)              # (w, depth+4)
    scalars = jnp.stack([a_x, a_y, c_0]).astype(jnp.float32)        # (3,) -> SMEM

    # Batch on the lane axis; no host-side padding — the pipeline's ragged last
    # block handles any tail (reads unspecified, writes dropped; per-lane math).
    xf = x.reshape(1, n).astype(jnp.float32)
    ylf = yl.reshape(1, n).astype(jnp.float32)

    tb = _choose_tile(n, max_tile)
    grid = (pl.cdiv(n, tb),)

    kernel = functools.partial(_only_high_kernel, width, depth, mxu_dtype)

    out = pl.pallas_call(
        kernel,
        out_shape=jax.ShapeDtypeStruct((1, n), jnp.float32),
        grid=grid,
        in_specs=[
            pl.BlockSpec((1, tb), lambda i: (0, i)),                # x tile
            pl.BlockSpec((1, tb), lambda i: (0, i)),                # yl tile
            pl.BlockSpec(mats.shape, lambda i: (0, 0)),             # packed hidden W^T
            pl.BlockSpec(vecs.shape, lambda i: (0, 0)),             # packed vectors
            pl.BlockSpec(memory_space=pltpu.MemorySpace.SMEM),      # [a_x, a_y, c_0]
        ],
        out_specs=pl.BlockSpec((1, tb), lambda i: (0, i)),
        compiler_params=pltpu.CompilerParams(
            dimension_semantics=("parallel",),
            vmem_limit_bytes=32 * 1024 * 1024,
        ),
    )(xf, ylf, mats, vecs, scalars)

    return out.reshape(n, 1)


def _init_mlp(key, in_dim, out_dim, width, depth):
    """depth = number of hidden->hidden layers (matches ms[1]/ms[3])."""
    dims = [in_dim] + [width] * (depth + 1) + [out_dim]
    Ws, bs = [], []
    for i in range(len(dims) - 1):
        key, kw, kb = jax.random.split(key, 3)
        fan_in = dims[i]
        Ws.append(
            jax.random.normal(kw, (dims[i], dims[i + 1]), jnp.float32)
            * (1.0 / jnp.sqrt(fan_in))
        )
        bs.append(jax.random.normal(kb, (1, dims[i + 1]), jnp.float32) * 0.01)
    return (Ws, bs), key


def _reference(x, yl, l_params, nl_params, alpha):
    """Pure-JAX reference (unfolded, matches the torch forward)."""
    h = jnp.concatenate([x, yl], axis=1)
    h_l = h
    for W, b in zip(*l_params):
        h_l = h_l @ W + b
    h_nl = h
    nl_W, nl_b = nl_params
    for i, (W, b) in enumerate(zip(nl_W, nl_b)):
        h_nl = h_nl @ W + b
        if i < len(nl_W) - 1:
            h_nl = jnp.tanh(h_nl)
    return alpha[0] * h_l + (1.0 - alpha[0]) * h_nl


if __name__ == "__main__":
    # ms = [l_width, l_depth, nl_width, nl_depth]
    ms = (32, 2, 32, 2)
    l_width, l_depth, nl_width, nl_depth = ms

    key = jax.random.PRNGKey(0)
    l_params, key = _init_mlp(key, 2, 1, l_width, l_depth)
    nl_params, key = _init_mlp(key, 2, 1, nl_width, nl_depth)
    alpha = jnp.array([0.5], dtype=jnp.float32)

    # Small batch, single whole-array block, f32 MXU operands -> strict check.
    batch = 8
    key, kx, ky = jax.random.split(key, 3)
    x = jax.random.normal(kx, (batch, 1), jnp.float32)
    yl = jax.random.normal(ky, (batch, 1), jnp.float32)

    y_high = jax.block_until_ready(
        only_high(x, yl, l_params, nl_params, alpha, mxu_dtype=jnp.float32))
    y_ref = _reference(x, yl, l_params, nl_params, alpha)
    assert y_high.shape == (batch, 1)
    assert jnp.allclose(y_high, y_ref, atol=1e-5, rtol=1e-5), (
        "Pallas kernel output does not match reference (small batch, f32 MXU)"
    )

    # Larger batch: 2 balanced grid steps (megacore-splittable), ragged last
    # block (3000 not a tile multiple), default bf16 MXU operands.  Tolerance
    # accounts for bf16 operand rounding in the hidden-layer matmuls.
    batch2 = 3000
    key, kx2, ky2 = jax.random.split(key, 3)
    x2 = jax.random.normal(kx2, (batch2, 1), jnp.float32)
    yl2 = jax.random.normal(ky2, (batch2, 1), jnp.float32)

    y_high2 = jax.block_until_ready(
        only_high(x2, yl2, l_params, nl_params, alpha))
    y_ref2 = _reference(x2, yl2, l_params, nl_params, alpha)
    assert y_high2.shape == (batch2, 1)
    assert jnp.allclose(y_high2, y_ref2, atol=2e-2, rtol=2e-2), (
        "Pallas kernel output does not match reference (large batch, bf16 MXU)"
    )
    assert bool(jnp.all(jnp.isfinite(y_high2))), "non-finite values in kernel output"

    print("KERNEL_OK")
</pallas_src>

<mosaic_0001>
module attributes {stable_mosaic.version = 11 : i64} {
  func.func @_only_high_kernel(%arg0: i32, %arg1: memref<1x8xf32, #tpu.memory_space<vmem>>, %arg2: memref<1x8xf32, #tpu.memory_space<vmem>>, %arg3: memref<64x32xf32, #tpu.memory_space<vmem>>, %arg4: memref<32x6xf32, #tpu.memory_space<vmem>>, %arg5: memref<3xf32, #tpu.memory_space<smem>>, %arg6: memref<1x8xf32, #tpu.memory_space<vmem>>) attributes {dimension_semantics = [#tpu.dimension_semantics<parallel>], iteration_bounds = array<i64: 1>, scalar_prefetch = 0 : i64, scratch_operands = 0 : i64, tpu.core_type = #tpu.core_type<tc>, window_params = [{transform_indices = @transform_0, window_bounds = array<i64: 1, 8>}, {transform_indices = @transform_1, window_bounds = array<i64: 1, 8>}, {pipeline_mode = #tpu.pipeline_mode<synchronous>, transform_indices = @transform_2, window_bounds = array<i64: 64, 32>}, {pipeline_mode = #tpu.pipeline_mode<synchronous>, transform_indices = @transform_3, window_bounds = array<i64: 32, 6>}, {transform_indices = @transform_4, window_bounds = array<i64: 3>}, {transform_indices = @transform_5, window_bounds = array<i64: 1, 8>}]} {
    %c0 = arith.constant 0 : index
    %c0_0 = arith.constant 0 : index
    %0 = vector.load %arg1[%c0, %c0_0] : memref<1x8xf32, #tpu.memory_space<vmem>>, vector<1x8xf32>
    %c0_1 = arith.constant 0 : index
    %c0_2 = arith.constant 0 : index
    %1 = vector.load %arg2[%c0_1, %c0_2] : memref<1x8xf32, #tpu.memory_space<vmem>>, vector<1x8xf32>
    %c0_3 = arith.constant 0 : index
    %c0_4 = arith.constant 0 : index
    %2 = vector.load %arg4[%c0_3, %c0_4] : memref<32x6xf32, #tpu.memory_space<vmem>>, vector<32x1xf32>
    %c0_5 = arith.constant 0 : index
    %c1 = arith.constant 1 : index
    %3 = vector.load %arg4[%c0_5, %c1] : memref<32x6xf32, #tpu.memory_space<vmem>>, vector<32x1xf32>
    %c0_6 = arith.constant 0 : index
    %c2 = arith.constant 2 : index
    %4 = vector.load %arg4[%c0_6, %c2] : memref<32x6xf32, #tpu.memory_space<vmem>>, vector<32x1xf32>
    %5 = vector.broadcast %2 : vector<32x1xf32> to vector<32x8xf32>
    %6 = vector.broadcast %0 : vector<1x8xf32> to vector<32x8xf32>
    %7 = arith.mulf %5, %6 : vector<32x8xf32>
    %8 = vector.broadcast %3 : vector<32x1xf32> to vector<32x8xf32>
    %9 = vector.broadcast %1 : vector<1x8xf32> to vector<32x8xf32>
    %10 = arith.mulf %8, %9 : vector<32x8xf32>
    %11 = arith.addf %7, %10 : vector<32x8xf32>
    %12 = vector.broadcast %4 : vector<32x1xf32> to vector<32x8xf32>
    %13 = arith.addf %11, %12 : vector<32x8xf32>
    %14 = math.tanh %13 : vector<32x8xf32>
    %c0_7 = arith.constant 0 : index
    %c0_8 = arith.constant 0 : index
    %15 = vector.load %arg3[%c0_7, %c0_8] : memref<64x32xf32, #tpu.memory_space<vmem>>, vector<32x32xf32>
    %c0_9 = arith.constant 0 : index
    %c3 = arith.constant 3 : index
    %16 = vector.load %arg4[%c0_9, %c3] : memref<32x6xf32, #tpu.memory_space<vmem>>, vector<32x1xf32>
    %cst = arith.constant dense<0.000000e+00> : vector<32x8xf32>
    %17 = tpu.matmul %15, %14, %cst {dimension_numbers = #tpu.dot_dimension_numbers<[1], [0], [0], [1], [0, 0, 1, 1], [], []>} : vector<32x32xf32>, vector<32x8xf32>, vector<32x8xf32> -> vector<32x8xf32>
    %18 = vector.broadcast %16 : vector<32x1xf32> to vector<32x8xf32>
    %19 = arith.addf %17, %18 : vector<32x8xf32>
    %20 = math.tanh %19 : vector<32x8xf32>
    %c32 = arith.constant 32 : index
    %c0_10 = arith.constant 0 : index
    %21 = vector.load %arg3[%c32, %c0_10] : memref<64x32xf32, #tpu.memory_space<vmem>>, vector<32x32xf32>
    %c0_11 = arith.constant 0 : index
    %c4 = arith.constant 4 : index
    %22 = vector.load %arg4[%c0_11, %c4] : memref<32x6xf32, #tpu.memory_space<vmem>>, vector<32x1xf32>
    %cst_12 = arith.constant dense<0.000000e+00> : vector<32x8xf32>
    %23 = tpu.matmul %21, %20, %cst_12 {dimension_numbers = #tpu.dot_dimension_numbers<[1], [0], [0], [1], [0, 0, 1, 1], [], []>} : vector<32x32xf32>, vector<32x8xf32>, vector<32x8xf32> -> vector<32x8xf32>
    %24 = vector.broadcast %22 : vector<32x1xf32> to vector<32x8xf32>
    %25 = arith.addf %23, %24 : vector<32x8xf32>
    %26 = math.tanh %25 : vector<32x8xf32>
    %c0_13 = arith.constant 0 : index
    %c5 = arith.constant 5 : index
    %27 = vector.load %arg4[%c0_13, %c5] : memref<32x6xf32, #tpu.memory_space<vmem>>, vector<32x1xf32>
    %28 = vector.broadcast %27 : vector<32x1xf32> to vector<32x8xf32>
    %29 = arith.mulf %28, %26 : vector<32x8xf32>
    %cst_14 = arith.constant dense<0.000000e+00> : vector<8xf32>
    %30 = vector.multi_reduction <add>, %29, %cst_14 [0] : vector<32x8xf32> to vector<8xf32>
    %31 = vector.shape_cast %30 : vector<8xf32> to vector<1x8xf32>
    %c0_15 = arith.constant 0 : index
    %32 = memref.load %arg5[%c0_15] : memref<3xf32, #tpu.memory_space<smem>>
    %c1_16 = arith.constant 1 : index
    %33 = memref.load %arg5[%c1_16] : memref<3xf32, #tpu.memory_space<smem>>
    %c2_17 = arith.constant 2 : index
    %34 = memref.load %arg5[%c2_17] : memref<3xf32, #tpu.memory_space<smem>>
    %35 = vector.broadcast %32 : f32 to vector<1x8xf32>
    %36 = arith.mulf %35, %0 : vector<1x8xf32>
    %37 = vector.broadcast %33 : f32 to vector<1x8xf32>
    %38 = arith.mulf %37, %1 : vector<1x8xf32>
    %39 = arith.addf %36, %38 : vector<1x8xf32>
    %40 = vector.broadcast %34 : f32 to vector<1x8xf32>
    %41 = arith.addf %39, %40 : vector<1x8xf32>
    %42 = arith.addf %41, %31 : vector<1x8xf32>
    %c0_18 = arith.constant 0 : index
    %c0_19 = arith.constant 0 : index
    %43 = vector.load %arg6[%c0_18, %c0_19] : memref<1x8xf32, #tpu.memory_space<vmem>>, vector<1x8xf32>
    tpu.vector_store %arg6[%c0_18, %c0_19], %42 {strides = array<i32>} : memref<1x8xf32, #tpu.memory_space<vmem>>, vector<1x8xf32>,
    return
  }
  func.func @transform_0(%arg0: i32) -> (i32, i32) {
    %c0_i32 = arith.constant 0 : i32
    %c0_i32_0 = arith.constant 0 : i32
    return %c0_i32, %arg0 : i32, i32
  }
  func.func @transform_1(%arg0: i32) -> (i32, i32) {
    %c0_i32 = arith.constant 0 : i32
    %c0_i32_0 = arith.constant 0 : i32
    return %c0_i32, %arg0 : i32, i32
  }
  func.func @transform_2(%arg0: i32) -> (i32, i32) {
    %c0_i32 = arith.constant 0 : i32
    %c0_i32_0 = arith.constant 0 : i32
    %c0_i32_1 = arith.constant 0 : i32
    return %c0_i32, %c0_i32_0 : i32, i32
  }
  func.func @transform_3(%arg0: i32) -> (i32, i32) {
    %c0_i32 = arith.constant 0 : i32
    %c0_i32_0 = arith.constant 0 : i32
    %c0_i32_1 = arith.constant 0 : i32
    return %c0_i32, %c0_i32_0 : i32, i32
  }
  func.func @transform_4(%arg0: i32) -> i32 {
    %c0_i32 = arith.constant 0 : i32
    %c0_i32_0 = arith.constant 0 : i32
    return %c0_i32 : i32
  }
  func.func @transform_5(%arg0: i32) -> (i32, i32) {
    %c0_i32 = arith.constant 0 : i32
    %c0_i32_0 = arith.constant 0 : i32
    return %c0_i32, %arg0 : i32, i32
  }
}

</mosaic_0001>

<llo_original>
// kernel: tpu_custom_call.1
$region0: #{tpu_custom_call.1}
  #allocation0 [shape = 'u32[]', space=smem, size = 0x4, offset = 0x4, fixed_abs, tag = 'smem constant byte address 0x4 - core index']
  #allocation1 [shape = 'u32[144,128]{1,0:T(1,128)}', space=vmem, size = 0x12000, scoped, tag = 'internal scratch']
  %s0 = inlined_call_operand.vmem [shape: f32[1,8], index: 0, kind: input, shape index: {}]
  %s1 = inlined_call_operand.vmem [shape: f32[1,8], index: 1, kind: input, shape index: {}]
  %s2 = inlined_call_operand.vmem [shape: f32[64,32], index: 2, kind: input, shape index: {}]
  %s3 = inlined_call_operand.vmem [shape: f32[32,6], index: 3, kind: input, shape index: {}]
  %s4 = inlined_call_operand.vmem [shape: f32[3], index: 4, kind: input, shape index: {}]
  %s5 = inlined_call_operand.hbm [shape: f32[1,8], index: 5, kind: output, shape index: {}]
  %s6 = sld [smem:[#allocation0]]
  $region34: #{tpu_custom_call.1} parent=0
    _
  %s8 = ssub.s32 1, %s6
  %s9 = scalar_select 0, %s8, %s6
  $region1: #{tpu_custom_call.1} parent=0
    #allocation2 [shape = 'u8[512]{0}', space=smem, size = 0x200, scoped, tag = 'input window, operand 4, single buffered']
    #allocation3 [shape = 's32[1]{0}', space=sflag, size = 0x4, scoped, tag = 'scoped memory for tpu_custom_call.1']
    #allocation4 [shape = 's32[1]{0}', space=sflag, size = 0x4, scoped, tag = 'scoped memory for tpu_custom_call.1']
    #allocation5 [shape = 'u8[512]{0}', space=vmem, size = 0x400, scoped, tag = 'output window, operand 0, single buffered']
    %10 = vsyncpa [#allocation4], 0
    %11 = vsyncpa [#allocation3], 0
    // Predicated region
    $region2: #{tpu_custom_call.1} parent=1 // pred_check
      _
    $region3: #{tpu_custom_call.1} parent=1 // pred_check_branch
      %13 = sbr.rel (0) target = $region5
    $region4: #{tpu_custom_call.1} parent=1 // pred_region
      _
    $region5: #{tpu_custom_call.1} parent=1 // pred_fallthru
      _
    // Predicated region
    $region6: #{tpu_custom_call.1} parent=1 // pred_check
      _
    $region7: #{tpu_custom_call.1} parent=1 // pred_check_branch
      %15 = sbr.rel (0) target = $region9
    $region8: #{tpu_custom_call.1} parent=1 // pred_region
      _
    $region9: #{tpu_custom_call.1} parent=1 // pred_fallthru
      _
    // Predicated region
    $region10: #{tpu_custom_call.1} parent=1 // pred_check
      _
    $region11: #{tpu_custom_call.1} parent=1 // pred_check_branch
      %17 = sbr.rel (0) target = $region13
    $region12: #{tpu_custom_call.1} parent=1 // pred_region
      _
    $region13: #{tpu_custom_call.1} parent=1 // pred_fallthru
      _
    // Predicated region
    $region14: #{tpu_custom_call.1} parent=1 // pred_check
      _
    $region15: #{tpu_custom_call.1} parent=1 // pred_check_branch
      %19 = sbr.rel (0) target = $region17
    $region16: #{tpu_custom_call.1} parent=1 // pred_region
      _
    $region17: #{tpu_custom_call.1} parent=1 // pred_fallthru
      _
    // Predicated region
    $region18: #{tpu_custom_call.1} parent=1 // pred_check
      _
    $region19: #{tpu_custom_call.1} parent=1 // pred_check_branch
      %21 = sbr.rel (0) target = $region21
    $region20: #{tpu_custom_call.1} parent=1 // pred_region
      %s23 = ssub.s32 16, 16
      %24 = vsyncadd [#allocation4], %s23
      %s26 = sshll.u32 %s4, 4
      %s27 = int_to_ptr.vmem [resolvable:$true] %s26
      %29 = dma.vmem_to_smem %s27, 16, [#allocation2], [#allocation4]
    $region21: #{tpu_custom_call.1} parent=1 // pred_fallthru
      _
    // Predicated region
    $region22: #{tpu_custom_call.1} parent=1 // pred_check
      _
    $region23: #{tpu_custom_call.1} parent=1 // pred_check_branch
      %31 = sbr.rel (0) target = $region25
    $region24: #{tpu_custom_call.1} parent=1 // pred_region
      %32 = dma.done [#allocation4], 16
    $region25: #{tpu_custom_call.1} parent=1 // pred_fallthru
      _
    %33 = sfence
    %v34 = vld [vmem:[%s0] sm:$0x1]
    %v35 = vld [vmem:[%s1] sm:$0x1]
    %v36 = vld [vmem:[%s3] sm:$0xff]
    %v37 = vld [vmem:[%s3 + $0x8] sm:$0xff]
    %v38 = vld [vmem:[%s3 + $0x10] sm:$0xff]
    %v39 = vld [vmem:[%s3 + $0x18] sm:$0xff]
    %41 = vset.pattern.permute.xlu0 0
    %42 = vperm.xlu0 %41, %v36
    %v43 = vpop.permute.xlu0 %42
    %46 = vset.pattern.permute.xlu0 0
    %47 = vperm.xlu0 %46, %v37
    %v48 = vpop.permute.xlu0 %47
    %51 = vset.pattern.permute.xlu0 0
    %52 = vperm.xlu0 %51, %v38
    %v53 = vpop.permute.xlu0 %52
    %56 = vset.pattern.permute.xlu0 0
    %57 = vperm.xlu0 %56, %v39
    %v58 = vpop.permute.xlu0 %57
    %v61 = vlaneseq
    %v62 = vshrl.u32 %v61, 7
    %v63 = vsub.s32 0, %v62
    %v64 = vrot.slane %v34, %v63
    %v66 = vmul.f32 %v43, %v64
    %v67 = vmul.f32 %v48, %v64
    %v68 = vmul.f32 %v53, %v64
    %v69 = vmul.f32 %v58, %v64
    %70 = vset.pattern.permute.xlu0 1
    %71 = vperm.xlu0 %70, %v36
    %v72 = vpop.permute.xlu0 %71
    %74 = vset.pattern.permute.xlu0 1
    %75 = vperm.xlu0 %74, %v37
    %v76 = vpop.permute.xlu0 %75
    %78 = vset.pattern.permute.xlu0 1
    %79 = vperm.xlu0 %78, %v38
    %v80 = vpop.permute.xlu0 %79
    %82 = vset.pattern.permute.xlu0 1
    %83 = vperm.xlu0 %82, %v39
    %v84 = vpop.permute.xlu0 %83
    %v87 = vlaneseq
    %v88 = vshrl.u32 %v87, 7
    %v89 = vsub.s32 0, %v88
    %v90 = vrot.slane %v35, %v89
    %v92 = vmul.f32 %v72, %v90
    %v93 = vmul.f32 %v76, %v90
    %v94 = vmul.f32 %v80, %v90
    %v95 = vmul.f32 %v84, %v90
    %v96 = vadd.f32 %v66, %v92
    %v97 = vadd.f32 %v67, %v93
    %v98 = vadd.f32 %v68, %v94
    %v99 = vadd.f32 %v69, %v95
    %100 = vset.pattern.permute.xlu0 2
    %101 = vperm.xlu0 %100, %v36
    %v102 = vpop.permute.xlu0 %101
    %104 = vset.pattern.permute.xlu0 2
    %105 = vperm.xlu0 %104, %v37
    %v106 = vpop.permute.xlu0 %105
    %108 = vset.pattern.permute.xlu0 2
    %109 = vperm.xlu0 %108, %v38
    %v110 = vpop.permute.xlu0 %109
    %112 = vset.pattern.permute.xlu0 2
    %113 = vperm.xlu0 %112, %v39
    %v114 = vpop.permute.xlu0 %113
    %v116 = vadd.f32 %v96, %v102
    %v117 = vadd.f32 %v97, %v106
    %v118 = vadd.f32 %v98, %v110
    %v119 = vadd.f32 %v99, %v114
    %v120 = vtanh.pop %v116
    %v121 = vtanh.pop %v117
    %v122 = vtanh.pop %v118
    %v123 = vtanh.pop %v119
    %v124 = vld [vmem:[%s2] sm:$0xff]
    %v125 = vld [vmem:[%s2 + $0x8] sm:$0xff]
    %v126 = vld [vmem:[%s2 + $0x10] sm:$0xff]
    %v127 = vld [vmem:[%s2 + $0x18] sm:$0xff]
    %128 = vset.pattern.permute.xlu0 3
    %129 = vperm.xlu0 %128, %v36
    %v130 = vpop.permute.xlu0 %129
    %132 = vset.pattern.permute.xlu0 3
    %133 = vperm.xlu0 %132, %v37
    %v134 = vpop.permute.xlu0 %133
    %136 = vset.pattern.permute.xlu0 3
    %137 = vperm.xlu0 %136, %v38
    %v138 = vpop.permute.xlu0 %137
    %140 = vset.pattern.permute.xlu0 3
    %141 = vperm.xlu0 %140, %v39
    %v142 = vpop.permute.xlu0 %141
    %vm144 = vcmask 261120
    %v146 = vsel %vm144, %v124, 0
    %v149 = vsel %vm144, %v125, 0
    %v152 = vsel %vm144, %v126, 0
    %v155 = vsel %vm144, %v127, 0
    %157 = vmatprep.subr.mxu0 0.0
    %158 = vmatpush1.msra.mxu0 %v120
    %159 = vmatprep.subr.mxu0 0.0
    %160 = vmatpush1.msra.mxu0 %v121
    %161 = vmatprep.subr.mxu0 0.0
    %162 = vmatpush1.msra.mxu0 %v122
    %163 = vmatprep.subr.mxu0 0.0
    %164 = vmatpush1.msra.mxu0 %v123
    %165 = vmatprep.subr.mxu0 0.0
    %166 = vmatpush1.msra.mxu0 0.0
    %167 = vmatprep.subr.mxu0 0.0
    %168 = vmatpush1.msra.mxu0 0.0
    %169 = vmatprep.subr.mxu0 0.0
    %170 = vmatpush1.msra.mxu0 0.0
    %171 = vmatprep.subr.mxu0 0.0
    %172 = vmatpush1.msra.mxu0 0.0
    %173 = vmatprep.subr.mxu0 0.0
    %174 = vmatpush1.msra.mxu0 0.0
    %175 = vmatprep.subr.mxu0 0.0
    %176 = vmatpush1.msra.mxu0 0.0
    %177 = vmatprep.subr.mxu0 0.0
    %178 = vmatpush1.msra.mxu0 0.0
    %179 = vmatprep.subr.mxu0 0.0
    %180 = vmatpush1.msra.mxu0 0.0
    %181 = vmatprep.subr.mxu0 0.0
    %182 = vmatpush1.msra.mxu0 0.0
    %183 = vmatprep.subr.mxu0 0.0
    %184 = vmatpush1.msra.mxu0 0.0
    %185 = vmatprep.subr.mxu0 0.0
    %186 = vmatpush1.msra.mxu0 0.0
    %187 = vmatprep.subr.mxu0 0.0
    %188 = vmatpush1.msra.mxu0 0.0
    %189 = vmatprep.subr.mxu0 0.0
    %190 = vmatpush1.msra.mxu0 0.0
    %191 = vmatprep.subr.mxu0 0.0
    %192 = vmatpush1.msra.mxu0 0.0
    %193 = vmatprep.subr.mxu0 0.0
    %194 = vmatpush1.msra.mxu0 0.0
    %195 = vmatprep.subr.mxu0 0.0
    %196 = vmatpush1.msra.mxu0 0.0
    %197 = vmatprep.subr.mxu0 0.0
    %198 = vmatpush1.msra.mxu0 0.0
    %199 = vmatprep.subr.mxu0 0.0
    %200 = vmatpush1.msra.mxu0 0.0
    %201 = vmatprep.subr.mxu0 0.0
    %202 = vmatpush1.msra.mxu0 0.0
    %203 = vmatprep.subr.mxu0 0.0
    %204 = vmatpush1.msra.mxu0 0.0
    %205 = vmatprep.subr.mxu0 0.0
    %206 = vmatpush1.msra.mxu0 0.0
    %207 = vmatprep.subr.mxu0 0.0
    %208 = vmatpush1.msra.mxu0 0.0
    %209 = vmatprep.subr.mxu0 0.0
    %210 = vmatpush1.msra.mxu0 0.0
    %211 = vmatprep.subr.mxu0 0.0
    %212 = vmatpush1.msra.mxu0 0.0
    %213 = vmatprep.subr.mxu0 0.0
    %214 = vmatpush1.msra.mxu0 0.0
    %215 = vmatprep.subr.mxu0 0.0
    %216 = vmatpush1.msra.mxu0 0.0
    %217 = vmatprep.subr.mxu0 0.0
    %218 = vmatpush1.msra.mxu0 0.0
    %219 = vmatprep.subr.mxu0 0.0
    %220 = vmatpush1.msra.mxu0 0.0
    %221 = vmatprep.mubr.f32.mxu0 0.0
    %222 = vmatmul.mubr.f32.gmra.mrb[0].mxu0 %v146
    %v223 = vpop.f32.mrb[0].mxu0
    %v224 = vadd.f32 %v130, %v223
    %v225 = vpop.f32.mrb[0].mxu0
    %226 = vmatprep.mubr.f32.mxu0 0.0
    %227 = vmatmul.mubr.f32.gmra.mrb[0].mxu0 %v149
    %v228 = vpop.f32.mrb[0].mxu0
    %v229 = vadd.f32 %v134, %v228
    %v230 = vpop.f32.mrb[0].mxu0
    %231 = vmatprep.mubr.f32.mxu0 0.0
    %232 = vmatmul.mubr.f32.gmra.mrb[0].mxu0 %v152
    %v233 = vpop.f32.mrb[0].mxu0
    %v234 = vadd.f32 %v138, %v233
    %v235 = vpop.f32.mrb[0].mxu0
    %236 = vmatprep.mubr.f32.mxu0 0.0
    %237 = vmatmul.mubr.f32.gmra.mrb[0].mxu0 %v155
    %v238 = vpop.f32.mrb[0].mxu0
    %v239 = vadd.f32 %v142, %v238
    %v240 = vpop.f32.mrb[0].mxu0
    %241 = vdwg.mxu0
    %v242 = vtanh.pop %v224
    %v243 = vtanh.pop %v229
    %v244 = vtanh.pop %v234
    %v245 = vtanh.pop %v239
    %v246 = vld [vmem:[%s2 + $0x20] sm:$0xff]
    %v247 = vld [vmem:[%s2 + $0x28] sm:$0xff]
    %v248 = vld [vmem:[%s2 + $0x30] sm:$0xff]
    %v249 = vld [vmem:[%s2 + $0x38] sm:$0xff]
    %250 = vset.pattern.permute.xlu0 4
    %251 = vperm.xlu0 %250, %v36
    %v252 = vpop.permute.xlu0 %251
    %254 = vset.pattern.permute.xlu0 4
    %255 = vperm.xlu0 %254, %v37
    %v256 = vpop.permute.xlu0 %255
    %258 = vset.pattern.permute.xlu0 4
    %259 = vperm.xlu0 %258, %v38
    %v260 = vpop.permute.xlu0 %259
    %262 = vset.pattern.permute.xlu0 4
    %263 = vperm.xlu0 %262, %v39
    %v264 = vpop.permute.xlu0 %263
    %v267 = vsel %vm144, %v246, 0
    %v270 = vsel %vm144, %v247, 0
    %v273 = vsel %vm144, %v248, 0
    %v276 = vsel %vm144, %v249, 0
    %278 = vmatprep.subr.mxu0 0.0
    %279 = vmatpush1.msra.mxu0 %v242
    %280 = vmatprep.subr.mxu0 0.0
    %281 = vmatpush1.msra.mxu0 %v243
    %282 = vmatprep.subr.mxu0 0.0
    %283 = vmatpush1.msra.mxu0 %v244
    %284 = vmatprep.subr.mxu0 0.0
    %285 = vmatpush1.msra.mxu0 %v245
    %286 = vmatprep.subr.mxu0 0.0
    %287 = vmatpush1.msra.mxu0 0.0
    %288 = vmatprep.subr.mxu0 0.0
    %289 = vmatpush1.msra.mxu0 0.0
    %290 = vmatprep.subr.mxu0 0.0
    %291 = vmatpush1.msra.mxu0 0.0
    %292 = vmatprep.subr.mxu0 0.0
    %293 = vmatpush1.msra.mxu0 0.0
    %294 = vmatprep.subr.mxu0 0.0
    %295 = vmatpush1.msra.mxu0 0.0
    %296 = vmatprep.subr.mxu0 0.0
    %297 = vmatpush1.msra.mxu0 0.0
    %298 = vmatprep.subr.mxu0 0.0
    %299 = vmatpush1.msra.mxu0 0.0
    %300 = vmatprep.subr.mxu0 0.0
    %301 = vmatpush1.msra.mxu0 0.0
    %302 = vmatprep.subr.mxu0 0.0
    %303 = vmatpush1.msra.mxu0 0.0
    %304 = vmatprep.subr.mxu0 0.0
    %305 = vmatpush1.msra.mxu0 0.0
    %306 = vmatprep.subr.mxu0 0.0
    %307 = vmatpush1.msra.mxu0 0.0
    %308 = vmatprep.subr.mxu0 0.0
    %309 = vmatpush1.msra.mxu0 0.0
    %310 = vmatprep.subr.mxu0 0.0
    %311 = vmatpush1.msra.mxu0 0.0
    %312 = vmatprep.subr.mxu0 0.0
    %313 = vmatpush1.msra.mxu0 0.0
    %314 = vmatprep.subr.mxu0 0.0
    %315 = vmatpush1.msra.mxu0 0.0
    %316 = vmatprep.subr.mxu0 0.0
    %317 = vmatpush1.msra.mxu0 0.0
    %318 = vmatprep.subr.mxu0 0.0
    %319 = vmatpush1.msra.mxu0 0.0
    %320 = vmatprep.subr.mxu0 0.0
    %321 = vmatpush1.msra.mxu0 0.0
    %322 = vmatprep.subr.mxu0 0.0
    %323 = vmatpush1.msra.mxu0 0.0
    %324 = vmatprep.subr.mxu0 0.0
    %325 = vmatpush1.msra.mxu0 0.0
    %326 = vmatprep.subr.mxu0 0.0
    %327 = vmatpush1.msra.mxu0 0.0
    %328 = vmatprep.subr.mxu0 0.0
    %329 = vmatpush1.msra.mxu0 0.0
    %330 = vmatprep.subr.mxu0 0.0
    %331 = vmatpush1.msra.mxu0 0.0
    %332 = vmatprep.subr.mxu0 0.0
    %333 = vmatpush1.msra.mxu0 0.0
    %334 = vmatprep.subr.mxu0 0.0
    %335 = vmatpush1.msra.mxu0 0.0
    %336 = vmatprep.subr.mxu0 0.0
    %337 = vmatpush1.msra.mxu0 0.0
    %338 = vmatprep.subr.mxu0 0.0
    %339 = vmatpush1.msra.mxu0 0.0
    %340 = vmatprep.subr.mxu0 0.0
    %341 = vmatpush1.msra.mxu0 0.0
    %342 = vmatprep.mubr.f32.mxu0 0.0
    %343 = vmatmul.mubr.f32.gmra.mrb[0].mxu0 %v267
    %v344 = vpop.f32.mrb[0].mxu0
    %v345 = vadd.f32 %v252, %v344
    %v346 = vpop.f32.mrb[0].mxu0
    %347 = vmatprep.mubr.f32.mxu0 0.0
    %348 = vmatmul.mubr.f32.gmra.mrb[0].mxu0 %v270
    %v349 = vpop.f32.mrb[0].mxu0
    %v350 = vadd.f32 %v256, %v349
    %v351 = vpop.f32.mrb[0].mxu0
    %352 = vmatprep.mubr.f32.mxu0 0.0
    %353 = vmatmul.mubr.f32.gmra.mrb[0].mxu0 %v273
    %v354 = vpop.f32.mrb[0].mxu0
    %v355 = vadd.f32 %v260, %v354
    %v356 = vpop.f32.mrb[0].mxu0
    %357 = vmatprep.mubr.f32.mxu0 0.0
    %358 = vmatmul.mubr.f32.gmra.mrb[0].mxu0 %v276
    %v359 = vpop.f32.mrb[0].mxu0
    %v360 = vadd.f32 %v264, %v359
    %v361 = vpop.f32.mrb[0].mxu0
    %362 = vdwg.mxu0
    %v363 = vtanh.pop %v345
    %v364 = vtanh.pop %v350
    %v365 = vtanh.pop %v355
    %v366 = vtanh.pop %v360
    %367 = vset.pattern.permute.xlu0 5
    %368 = vperm.xlu0 %367, %v36
    %v369 = vpop.permute.xlu0 %368
    %371 = vset.pattern.permute.xlu0 5
    %372 = vperm.xlu0 %371, %v37
    %v373 = vpop.permute.xlu0 %372
    %375 = vset.pattern.permute.xlu0 5
    %376 = vperm.xlu0 %375, %v38
    %v377 = vpop.permute.xlu0 %376
    %379 = vset.pattern.permute.xlu0 5
    %380 = vperm.xlu0 %379, %v39
    %v381 = vpop.permute.xlu0 %380
    %v383 = vmul.f32 %v369, %v363
    %v384 = vmul.f32 %v373, %v364
    %v385 = vmul.f32 %v377, %v365
    %v386 = vmul.f32 %v381, %v366
    %vm387 = vcmask 64512
    %v388 = vsel %vm387, %v383, 0.0
    %v389 = vsel %vm387, %v384, 0.0
    %v390 = vadd.f32 %v388, %v389
    %v391 = vsel %vm387, %v385, 0.0
    %v392 = vadd.f32 %v390, %v391
    %v393 = vsel %vm387, %v386, 0.0
    %v394 = vadd.f32 %v392, %v393
    %v395 = vrot.slane %v394, 4
    %v396 = vadd.f32 %v394, %v395
    %v397 = vrot.slane %v396, 2
    %v398 = vadd.f32 %v396, %v397
    %v399 = vrot.slane %v398, 1
    %v400 = vadd.f32 %v398, %v399
    %s401 = sld [smem:[#allocation2]]
    %s402 = sld [smem:[#allocation2 + $0x1]]
    %s403 = sld [smem:[#allocation2 + $0x2]]
    %v404 = vstv %s401
    %v405 = vmul.f32 %v404, %v34
    %v406 = vstv %s402
    %v407 = vmul.f32 %v406, %v35
    %v408 = vadd.f32 %v405, %v407
    %v409 = vstv %s403
    %v410 = vadd.f32 %v408, %v409
    %v411 = vadd.f32 %v410, %v400
    %vm412 = vcmask 57344
    %413 = vst.msk [vmem:[#allocation5] sm:$0x1] %vm412, %v411
    // Predicated region
    $region26: #{tpu_custom_call.1} parent=1 // pred_check
      _
    $region27: #{tpu_custom_call.1} parent=1 // pred_check_branch
      %415 = sbr.rel (0) target = $region29
    $region28: #{tpu_custom_call.1} parent=1 // pred_region
      %s417 = ssub.s32 16, 16
      %418 = vsyncadd [#allocation3], %s417
      %s420 = sshll.u32 [#allocation5], 4
      %s421 = int_to_ptr.vmem [resolvable:$true] %s420
      %423 = dma.vmem_to_hbm [thread:$0]  %s421, 16, %s5, [#allocation3]
    $region29: #{tpu_custom_call.1} parent=1 // pred_fallthru
      _
    // Predicated region
    $region30: #{tpu_custom_call.1} parent=1 // pred_check
      _
    $region31: #{tpu_custom_call.1} parent=1 // pred_check_branch
      %425 = sbr.rel (0) target = $region33
    $region32: #{tpu_custom_call.1} parent=1 // pred_region
      %426 = dma.done [#allocation3], 16
    $region33: #{tpu_custom_call.1} parent=1 // pred_fallthru
      _
    %427 = vsyncpa [#allocation3], 1
    %428 = vsyncpa [#allocation4], 1

</llo_original>
